<compile_context>
chip_gen: v5e
topology: v5e:2x2
jax: 0.10.0
libtpu: 0.0.40
codegen_flags: <defaults>
</compile_context>

<pallas_src>
import math
import functools

import numpy as np
import jax
import jax.numpy as jnp
from jax.experimental import pallas as pl
from jax.experimental.pallas import tpu as pltpu


def _pe_add_kernel(x_ref, pe_ref, o_ref):
    """o = x + pe.   x_ref/o_ref: VMEM (TB, TS);  pe_ref: VMEM (1, TS)."""
    o_ref[...] = x_ref[...] + pe_ref[...]


def _build_pe(C, H, W, dtype):
    """B-independent positional-encoding table, identical to the torch code."""
    channels = int(math.ceil(C / 2))
    if channels % 2 != 0:
        raise ValueError(
            f"PositionalEncoding2D requires ceil(C/2) to be even "
            f"(got C={C}, channels={channels}) -- same constraint as the "
            f"torch module's slice-assign construction.")
    inv_freq = 1.0 / (10000.0 ** (jnp.arange(0, channels, 2, dtype=jnp.float32)
                                  / channels))
    pos_x = jnp.arange(H, dtype=jnp.float32)
    pos_y = jnp.arange(W, dtype=jnp.float32)
    sin_inp_x = inv_freq[:, None] * pos_x[None, :]                    # (nfreq, H)
    sin_inp_y = inv_freq[:, None] * pos_y[None, :]                    # (nfreq, W)
    emb_x = jnp.concatenate([jnp.sin(sin_inp_x), jnp.cos(sin_inp_x)], 0)[:, :, None]
    emb_y = jnp.concatenate([jnp.sin(sin_inp_y), jnp.cos(sin_inp_y)], 0)[:, None, :]
    emb = jnp.zeros((2 * channels, H, W), dtype=jnp.float32)
    emb = emb.at[:channels].set(emb_x)
    emb = emb.at[channels:2 * channels].set(emb_y)
    return emb[:C].astype(dtype)                                      # (C, H, W)


def _sublane(itemsize):
    return {4: 8, 2: 16, 1: 32}.get(itemsize, 8)


def _vmem_params():
    """(working-set budget, vmem_limit_bytes), tuned per TPU generation."""
    mib = 1024 * 1024
    kind = ""
    try:
        kind = jax.devices()[0].device_kind.lower()
    except Exception:
        pass
    if "v6" in kind:      # 128 MiB physical VMEM: bigger blocks, fewer steps
        return 56 * mib, 100 * mib
    if "v7" in kind:      # 64 MiB physical per TensorCore
        return 24 * mib, 48 * mib
    # v5e (16 MiB scoped default, 128 MiB physical) and unknown chips
    return 24 * mib, 64 * mib


def _choose_tiles(B, N, itemsize, budget):
    """Largest (tb, ts) block of x:(B, N) / pe:(1, N) under `budget` bytes.

    Block-shape constraints: tb equals B or is a multiple of the dtype sublane
    tile; ts equals N or is a multiple of 128 (all divisors).  Full-N rows are
    preferred (one contiguous run per batch row); N is only split when a full
    row cannot fit.
    """
    sub = _sublane(itemsize)
    pad = lambda v, m: -(-v // m) * m

    def fits(tb, ts):
        # double-buffered x-in + out blocks + double-buffered pe row,
        # including sublane (8/16/32) and lane (128) padding.
        xo = 4 * pad(tb, sub) * pad(ts, 128)
        pe = 2 * sub * pad(ts, 128)
        return (xo + pe) * itemsize <= budget

    tb_cands = sorted({B} | {d for d in range(sub, B, sub) if B % d == 0},
                      reverse=True)
    ts_cands = [N]
    if N % 128 == 0:
        n128 = N // 128
        ts_cands += [d * 128 for d in range(n128, 0, -1) if n128 % d == 0]
    ts_cands = sorted(set(ts_cands), reverse=True)

    tb, ts = tb_cands[-1], ts_cands[-1]
    # 1) Keep full (contiguous) rows if any batch tile fits.
    for cand in tb_cands:
        if fits(cand, N):
            tb, ts = cand, N
            break
    else:
        # 2) Split N: smallest batch tile, largest lane-aligned chunk that fits.
        for cand in ts_cands:
            if fits(tb, cand):
                ts = cand
                break
        # else: nothing fits the budget (e.g. huge N not a multiple of 128);
        # keep the smallest expressible block and rely on vmem_limit headroom.

    # Guarantee >=2 grid blocks when possible so a "parallel" axis can be
    # sharded across v7x's two TensorCores (and DMA/compute can overlap on
    # single-TC chips).  Prefer a batch split (keeps full contiguous rows).
    if (B // tb) * (N // ts) == 1:
        if len(tb_cands) > 1:
            tb = tb_cands[1]
        elif N % 256 == 0:
            ts = N // 2
    return tb, ts


@functools.partial(jax.jit, static_argnames=("channel_last",))
def positional_encoding_2d_add(x, channel_last=False):
    """Equivalent of PositionalEncoding2D(channels=C, channel_last=...)(x)."""
    # TODO(synk): the torch module's `pos_cache` memoization and `trainable`
    # flag are stateful nn.Module behaviors with no Pallas equivalent; the
    # encoding is recomputed statelessly every call (numerically identical).
    if channel_last:
        # Note: the torch channel_last branch permutes x to NCHW but then adds
        # an NHWC-permuted emb to it; we implement the evident intent (pe added
        # at matching channel positions, input layout preserved).
        B, H, W, C = x.shape
    else:
        B, C, H, W = x.shape

    pe = _build_pe(C, H, W, x.dtype)                 # (C, H, W) -- tiny table
    if channel_last:
        pe = jnp.transpose(pe, (1, 2, 0))            # (H, W, C); transpose the
                                                     # table, never x

    N = C * H * W
    itemsize = jnp.dtype(x.dtype).itemsize
    x2 = x.reshape(B, N)                             # free reshape, contiguous
    pe_row = pe.reshape(1, N)

    budget, vmem_limit = _vmem_params()
    tb, ts = _choose_tiles(B, N, itemsize, budget)

    out2 = pl.pallas_call(
        _pe_add_kernel,
        out_shape=jax.ShapeDtypeStruct((B, N), x.dtype),
        grid_spec=pl.GridSpec(
            grid=(N // ts, B // tb),                 # spatial outer, batch inner
            in_specs=[
                pl.BlockSpec((tb, ts), lambda s, b: (b, s)),
                pl.BlockSpec((1, ts), lambda s, b: (0, s)),   # batch-invariant
            ],
            out_specs=pl.BlockSpec((tb, ts), lambda s, b: (b, s)),
        ),
        compiler_params=pltpu.CompilerParams(
            dimension_semantics=("parallel", "parallel"),
            vmem_limit_bytes=vmem_limit),
        cost_estimate=pl.CostEstimate(
            flops=B * N,
            transcendentals=0,
            bytes_accessed=(2 * B * N + N) * itemsize),
    )(x2, pe_row)

    return out2.reshape(x.shape)


def _reference(x):
    """Pure numpy port of the torch forward pass (NCHW, for verification)."""
    x = np.asarray(x)
    B, C, H, W = x.shape
    channels = int(math.ceil(C / 2))
    inv_freq = 1.0 / (10000.0 ** (np.arange(0, channels, 2, dtype=np.float32)
                                  / channels))
    pos_x = np.arange(H, dtype=np.float32)
    pos_y = np.arange(W, dtype=np.float32)
    sin_inp_x = np.einsum('i,j->ij', inv_freq, pos_x)
    sin_inp_y = np.einsum('i,j->ij', inv_freq, pos_y)
    emb_x = np.concatenate([np.sin(sin_inp_x), np.cos(sin_inp_x)], axis=0)[:, :, None]
    emb_y = np.concatenate([np.sin(sin_inp_y), np.cos(sin_inp_y)], axis=0)[:, None, :]
    emb = np.zeros((channels * 2, H, W), dtype=x.dtype)
    emb[:channels] = emb_x
    emb[channels:2 * channels] = emb_y
    emb = emb[:C]
    return x + emb[None]


if __name__ == "__main__":
    key = jax.random.PRNGKey(0)
    B, C, H, W = 2, 4, 16, 16
    x = jax.random.normal(key, (B, C, H, W), dtype=jnp.float32)
    x_np = np.asarray(x)

    # NCHW (default) path
    out = jax.block_until_ready(positional_encoding_2d_add(x))
    ref = _reference(x_np)
    assert out.shape == x.shape and out.dtype == x.dtype
    np.testing.assert_allclose(np.asarray(out), ref, rtol=1e-5, atol=1e-5)

    # channel_last (NHWC) path -- no activation transposes inside the wrapper
    x_cl = jnp.transpose(x, (0, 2, 3, 1))
    out_cl = jax.block_until_ready(
        positional_encoding_2d_add(x_cl, channel_last=True))
    ref_cl = np.transpose(ref, (0, 2, 3, 1))
    assert out_cl.shape == x_cl.shape and out_cl.dtype == x_cl.dtype
    np.testing.assert_allclose(np.asarray(out_cl), ref_cl, rtol=1e-5, atol=1e-5)

    print("KERNEL_OK")
</pallas_src>

<mosaic_0001>
module attributes {stable_mosaic.version = 11 : i64} {
  func.func @_pe_add_kernel(%arg0: i32, %arg1: i32, %arg2: memref<2x512xf32, #tpu.memory_space<vmem>>, %arg3: memref<1x512xf32, #tpu.memory_space<vmem>>, %arg4: memref<2x512xf32, #tpu.memory_space<vmem>>) attributes {dimension_semantics = [#tpu.dimension_semantics<parallel>, #tpu.dimension_semantics<parallel>], iteration_bounds = array<i64: 2, 1>, scalar_prefetch = 0 : i64, scratch_operands = 0 : i64, tpu.core_type = #tpu.core_type<tc>, window_params = [{transform_indices = @transform_0, window_bounds = array<i64: 2, 512>}, {transform_indices = @transform_1, window_bounds = array<i64: 1, 512>}, {transform_indices = @transform_2, window_bounds = array<i64: 2, 512>}]} {
    %c0 = arith.constant 0 : index
    %c0_0 = arith.constant 0 : index
    %0 = vector.load %arg2[%c0, %c0_0] : memref<2x512xf32, #tpu.memory_space<vmem>>, vector<2x512xf32>
    %c0_1 = arith.constant 0 : index
    %c0_2 = arith.constant 0 : index
    %1 = vector.load %arg3[%c0_1, %c0_2] : memref<1x512xf32, #tpu.memory_space<vmem>>, vector<1x512xf32>
    %2 = vector.broadcast %1 : vector<1x512xf32> to vector<2x512xf32>
    %3 = arith.addf %0, %2 : vector<2x512xf32>
    %c0_3 = arith.constant 0 : index
    %c0_4 = arith.constant 0 : index
    %4 = vector.load %arg4[%c0_3, %c0_4] : memref<2x512xf32, #tpu.memory_space<vmem>>, vector<2x512xf32>
    tpu.vector_store %arg4[%c0_3, %c0_4], %3 {strides = array<i32>} : memref<2x512xf32, #tpu.memory_space<vmem>>, vector<2x512xf32>,
    return
  }
  func.func @transform_0(%arg0: i32, %arg1: i32) -> (i32, i32) {
    %c0_i32 = arith.constant 0 : i32
    return %arg1, %arg0 : i32, i32
  }
  func.func @transform_1(%arg0: i32, %arg1: i32) -> (i32, i32) {
    %c0_i32 = arith.constant 0 : i32
    %c0_i32_0 = arith.constant 0 : i32
    return %c0_i32, %arg0 : i32, i32
  }
  func.func @transform_2(%arg0: i32, %arg1: i32) -> (i32, i32) {
    %c0_i32 = arith.constant 0 : i32
    return %arg1, %arg0 : i32, i32
  }
}

</mosaic_0001>

<llo_original>
// kernel: positional_encoding_2d_add.1
$region0: #{positional_encoding_2d_add.1}
  #allocation0 [shape = 'u32[]', space=smem, size = 0x4, offset = 0x4, fixed_abs, tag = 'smem constant byte address 0x4 - core index']
  #allocation1 [shape = 'u32[72,128]{1,0:T(1,128)}', space=vmem, size = 0x9000, scoped, tag = 'internal scratch']
  %s0 = inlined_call_operand.vmem [shape: f32[2,1024], index: 0, kind: input, shape index: {}]
  %s1 = inlined_call_operand.vmem [shape: f32[1,1024], index: 1, kind: input, shape index: {}]
  %s2 = inlined_call_operand.vmem [shape: f32[2,1024], index: 2, kind: output, shape index: {}]
  %s3 = sld [smem:[#allocation0]]
  $region41: #{positional_encoding_2d_add.1} parent=0
    _
  %s5 = ssub.s32 1, %s3
  %s6 = scalar_select 0, %s5, %s3
  loop: start=0, step=1, limit=4
  $region2: #{positional_encoding_2d_add.1} parent=0 // loop_pre_header
    _
  $region3: #{positional_encoding_2d_add.1} parent=0 // loop_header
    %s8 = sphi 0, %s12
    %p9 = scmp.ge.s32.totalorder %s8, 4
    %s15 = sphi 0, %s27
    %s16 = sphi 0, %s23
    %s17 = sphi 0, %s15
    %s18 = sphi 0, %s16
    %s19 = sphi 0, %s17
    %s20 = sphi 0, %s18
    %s32 = sphi 0, %s34
    %s35 = sphi 0, %s32
    %s36 = sphi 0, %s35
    %s52 = sphi 0, %s36
    %s58 = sphi 0, %s60
    %s61 = sphi 0, %s58
    %s62 = sphi 0, %s61
    %s78 = sphi 0, %s62
    %s86 = sphi 0, %s88
    %s89 = sphi 0, %s86
    %s90 = sphi 0, %s89
    %s106 = sphi 0, %s90
  $region4: #{positional_encoding_2d_add.1} parent=0 // loop_header_branch
    %11 = sbr.rel (%p9) target = $region8
  $region5: #{positional_encoding_2d_add.1} parent=0 // loop_body
    %s13 = ssub.s32 %s8, 1
    %s14 = ssub.s32 %s8, 2
    %s21 = sadd.s32 1, %s16
    %p22 = scmp.ge.s32.totalorder %s21, 1
    %s23 = scalar_select %p22, 0, %s21
    %s24 = sadd.s32 1, %s15
    %s25 = scalar_select %p22, %s24, %s15
    %p26 = scmp.ge.s32.totalorder %s25, 2
    %s27 = scalar_select %p26, 0, %s25
    %s28 = ssub.s32 %s16, %s23
    %s29 = ssub.s32 %s15, %s27
    %s30 = sor.u32 %s28, %s29
    %p31 = scmp.eq.s32.totalorder %s30, 0
    %s33 = sadd.s32 %s32, 1
    %s34 = scalar_select %p31, %s32, %s33
    %p37 = pneg %p31
    %p38 = scmp.eq.s32.totalorder %s8, 1
    %p39 = por %p37, %p38
    %p40 = scmp.ne.s32.totalorder %s32, %s35
    %p41 = scmp.eq.s32.totalorder %s8, 0
    %p42 = por %p40, %p41
    %p43 = scmp.ne.s32.totalorder %s32, %s35
    %p44 = scmp.eq.s32.totalorder %s13, 1
    %p45 = por %p43, %p44
    %p46 = scmp.ne.s32.totalorder %s35, %s36
    %p47 = scmp.eq.s32.totalorder %s13, 0
    %p48 = por %p46, %p47
    %p49 = scmp.ne.s32.totalorder %s35, %s36
    %p50 = scmp.eq.s32.totalorder %s14, 1
    %p51 = por %p49, %p50
    %p53 = scmp.ne.s32.totalorder %s36, %s52
    %p54 = scmp.eq.s32.totalorder %s14, 0
    %p55 = por %p53, %p54
    %s56 = ssub.s32 %s15, %s27
    %p57 = scmp.eq.s32.totalorder %s56, 0
    %s59 = sadd.s32 %s58, 1
    %s60 = scalar_select %p57, %s58, %s59
    %p63 = pneg %p57
    %p64 = scmp.eq.s32.totalorder %s8, 1
    %p65 = por %p63, %p64
    %p66 = scmp.ne.s32.totalorder %s58, %s61
    %p67 = scmp.eq.s32.totalorder %s8, 0
    %p68 = por %p66, %p67
    %p69 = scmp.ne.s32.totalorder %s58, %s61
    %p70 = scmp.eq.s32.totalorder %s13, 1
    %p71 = por %p69, %p70
    %p72 = scmp.ne.s32.totalorder %s61, %s62
    %p73 = scmp.eq.s32.totalorder %s13, 0
    %p74 = por %p72, %p73
    %p75 = scmp.ne.s32.totalorder %s61, %s62
    %p76 = scmp.eq.s32.totalorder %s14, 1
    %p77 = por %p75, %p76
    %p79 = scmp.ne.s32.totalorder %s62, %s78
    %p80 = scmp.eq.s32.totalorder %s14, 0
    %p81 = por %p79, %p80
    %s82 = ssub.s32 %s16, %s23
    %s83 = ssub.s32 %s15, %s27
    %s84 = sor.u32 %s82, %s83
    %p85 = scmp.eq.s32.totalorder %s84, 0
    %s87 = sadd.s32 %s86, 1
    %s88 = scalar_select %p85, %s86, %s87
    %p91 = pneg %p85
    %p92 = scmp.eq.s32.totalorder %s8, 1
    %p93 = por %p91, %p92
    %p94 = scmp.ne.s32.totalorder %s86, %s89
    %p95 = scmp.eq.s32.totalorder %s8, 0
    %p96 = por %p94, %p95
    %p97 = scmp.ne.s32.totalorder %s86, %s89
    %p98 = scmp.eq.s32.totalorder %s13, 1
    %p99 = por %p97, %p98
    %p100 = scmp.ne.s32.totalorder %s89, %s90
    %p101 = scmp.eq.s32.totalorder %s13, 0
    %p102 = por %p100, %p101
    %p103 = scmp.ne.s32.totalorder %s89, %s90
    %p104 = scmp.eq.s32.totalorder %s14, 1
    %p105 = por %p103, %p104
    %p107 = scmp.ne.s32.totalorder %s90, %s106
    %p108 = scmp.eq.s32.totalorder %s14, 0
    %p109 = por %p107, %p108
    %p110 = scmp.le.s32.totalorder 1, %s8
    %p111 = scmp.lt.s32.totalorder %s8, 3
    %p112 = pnand %p110, %p111
    %p113 = pneg %p112
    // Predicated region
    $region9: #{positional_encoding_2d_add.1} parent=5 // pred_check
      _
    $region10: #{positional_encoding_2d_add.1} parent=5 // pred_check_branch
      %115 = sbr.rel (%p112) target = $region12
    $region11: #{positional_encoding_2d_add.1} parent=5 // pred_region
      %s116 = ssub.s32 %s8, 1
    $region12: #{positional_encoding_2d_add.1} parent=5 // pred_fallthru
      _
    %p117 = scmp.lt.s32.totalorder %s8, 2
    // Predicated region
    $region13: #{positional_encoding_2d_add.1} parent=5 // pred_check
      %p118 = pneg %p117
    $region14: #{positional_encoding_2d_add.1} parent=5 // pred_check_branch
      %120 = sbr.rel (%p118) target = $region16
    $region15: #{positional_encoding_2d_add.1} parent=5 // pred_region
      // Predicated region
      $region17: #{positional_encoding_2d_add.1} parent=15 // pred_check
        %p121 = pneg %p42
      $region18: #{positional_encoding_2d_add.1} parent=15 // pred_check_branch
        %123 = sbr.rel (%p121) target = $region20
      $region19: #{positional_encoding_2d_add.1} parent=15 // pred_region
        %s124 = smul.u32 4, %s15
        %p125 = scmp.lt.s32.totalorder %s16, 0
        %s126 = scalar_select %p125, %s16, 0
        %p127 = scmp.lt.s32.totalorder %s124, 7
        %s128 = scalar_select %p127, %s124, 7
        %s129 = smul.addr %s126, 8
        %s130 = sadd.s32 %s128, %s129
        %s131 = smul.addr %s130, 2
        %s132 = scalar_lea.vmem %s0, %s131
        %s133 = smul.u32 4, %s15
      $region20: #{positional_encoding_2d_add.1} parent=15 // pred_fallthru
        _
      // Predicated region
      $region21: #{positional_encoding_2d_add.1} parent=15 // pred_check
        %p134 = pneg %p68
      $region22: #{positional_encoding_2d_add.1} parent=15 // pred_check_branch
        %136 = sbr.rel (%p134) target = $region24
      $region23: #{positional_encoding_2d_add.1} parent=15 // pred_region
        %s137 = smul.u32 4, %s15
        %p138 = scmp.lt.s32.totalorder %s137, 7
        %s139 = scalar_select %p138, %s137, 7
        %s140 = scalar_lea.vmem %s1, %s139
        %s141 = smul.u32 4, %s15
      $region24: #{positional_encoding_2d_add.1} parent=15 // pred_fallthru
        _
    $region16: #{positional_encoding_2d_add.1} parent=5 // pred_fallthru
      _
    %p142 = scmp.le.s32.totalorder 1, %s8
    %p143 = scmp.lt.s32.totalorder %s8, 3
    %p144 = pnand %p142, %p143
    %p145 = pneg %p144
    // Predicated region
    $region25: #{positional_encoding_2d_add.1} parent=5 // pred_check
      _
    $region26: #{positional_encoding_2d_add.1} parent=5 // pred_check_branch
      %147 = sbr.rel (%p144) target = $region28
    $region27: #{positional_encoding_2d_add.1} parent=5 // pred_region
      %s148 = ssub.s32 %s8, 1
      %s149 = smul.u32 4, %s17
      %p150 = scmp.lt.s32.totalorder %s18, 0
      %s151 = scalar_select %p150, %s18, 0
      %p152 = scmp.lt.s32.totalorder %s149, 7
      %s153 = scalar_select %p152, %s149, 7
      %s154 = smul.addr %s151, 8
      %s155 = sadd.s32 %s153, %s154
      %s156 = smul.addr %s155, 2
      %s157 = scalar_lea.vmem %s0, %s156
      %p158 = pneg %p48
      %p159 = pneg %p45
      %s160 = smul.u32 4, %s17
      %p161 = scmp.lt.s32.totalorder %s160, 7
      %s162 = scalar_select %p161, %s160, 7
      %s163 = scalar_lea.vmem %s1, %s162
      %p164 = pneg %p74
      %p165 = pneg %p71
      %p166 = pneg %p102
      %p167 = pneg %p99
      %s168 = smul.u32 4, %s17
      %p169 = scmp.lt.s32.totalorder %s18, 0
      %s170 = scalar_select %p169, %s18, 0
      %p171 = scmp.lt.s32.totalorder %s168, 7
      %s172 = scalar_select %p171, %s168, 7
      %s173 = smul.addr %s170, 8
      %s174 = sadd.s32 %s172, %s173
      %s175 = smul.addr %s174, 2
      %s176 = scalar_lea.vmem %s2, %s175
      %s177 = smul.u32 4, %s17
      %p178 = scmp.lt.s32.totalorder %s18, 0
      %s179 = scalar_select %p178, %s18, 0
      %p180 = scmp.lt.s32.totalorder %s177, 7
      %s181 = scalar_select %p180, %s177, 7
      %s182 = smul.addr %s179, 8
      %s183 = sadd.s32 %s181, %s182
      %s184 = smul.addr %s183, 2
      %s185 = scalar_lea.vmem %s0, %s184
      %s186 = smul.u32 4, %s17
      %s187 = smul.u32 4, %s17
      %p188 = scmp.lt.s32.totalorder %s187, 7
      %s189 = scalar_select %p188, %s187, 7
      %s190 = scalar_lea.vmem %s1, %s189
      %s191 = smul.u32 4, %s17
      %s192 = smul.u32 4, %s17
      %p193 = scmp.lt.s32.totalorder %s18, 0
      %s194 = scalar_select %p193, %s18, 0
      %p195 = scmp.lt.s32.totalorder %s192, 7
      %s196 = scalar_select %p195, %s192, 7
      %s197 = smul.addr %s194, 8
      %s198 = sadd.s32 %s196, %s197
      %s199 = smul.addr %s198, 2
      %s200 = scalar_lea.vmem %s2, %s199
      %s201 = smul.u32 4, %s17
      %v202 = vld [vmem:[%s185] sm:$0xff]
      %v203 = vld [vmem:[%s190] sm:$0xf]
      %v205 = vperm.slane %v203, 0
      %v206 = vperm.slane %v203, 1
      %v207 = vperm.slane %v203, 2
      %v208 = vperm.slane %v203, 3
      %v209 = vrot.slane %v206, 6
      %v210 = vrot.slane %v207, 4
      %v211 = vrot.slane %v208, 2
      %vm212 = vcmask 1041408
      %v213 = vsel %vm212, %v205, %v209
      %vm214 = vcmask 1045508
      %v215 = vsel %vm214, %v210, %v211
      %vm216 = vcmask 1043456
      %v217 = vsel %vm216, %v213, %v215
      %v219 = vadd.f32 %v202, %v217
      %220 = vst [vmem:[%s200] sm:$0xff] %v219
      %s221 = smul.u32 4, %s17
      %p222 = scmp.lt.s32.totalorder %s18, 0
      %s223 = scalar_select %p222, %s18, 0
      %p224 = scmp.lt.s32.totalorder %s221, 7
      %s225 = scalar_select %p224, %s221, 7
      %s226 = smul.addr %s223, 8
      %s227 = sadd.s32 %s225, %s226
      %s228 = smul.addr %s227, 2
      %s229 = scalar_lea.vmem %s2, %s228
      // Predicated region
      $region29: #{positional_encoding_2d_add.1} parent=27 // pred_check
        %p230 = pneg %p99
      $region30: #{positional_encoding_2d_add.1} parent=27 // pred_check_branch
        %232 = sbr.rel (%p230) target = $region32
      $region31: #{positional_encoding_2d_add.1} parent=27 // pred_region
        %s233 = smul.u32 4, %s17
      $region32: #{positional_encoding_2d_add.1} parent=27 // pred_fallthru
        _
    $region28: #{positional_encoding_2d_add.1} parent=5 // pred_fallthru
      _
    %p234 = scmp.le.s32.totalorder 2, %s8
    // Predicated region
    $region33: #{positional_encoding_2d_add.1} parent=5 // pred_check
      %p235 = pneg %p234
    $region34: #{positional_encoding_2d_add.1} parent=5 // pred_check_branch
      %237 = sbr.rel (%p235) target = $region36
    $region35: #{positional_encoding_2d_add.1} parent=5 // pred_region
      %s238 = ssub.s32 %s8, 2
      // Predicated region
      $region37: #{positional_encoding_2d_add.1} parent=35 // pred_check
        %p239 = pneg %p105
      $region38: #{positional_encoding_2d_add.1} parent=35 // pred_check_branch
        %241 = sbr.rel (%p239) target = $region40
      $region39: #{positional_encoding_2d_add.1} parent=35 // pred_region
        %s242 = smul.u32 4, %s19
        %p243 = scmp.lt.s32.totalorder %s20, 0
        %s244 = scalar_select %p243, %s20, 0
        %p245 = scmp.lt.s32.totalorder %s242, 7
        %s246 = scalar_select %p245, %s242, 7
        %s247 = smul.addr %s244, 8
        %s248 = sadd.s32 %s246, %s247
        %s249 = smul.addr %s248, 2
        %s250 = scalar_lea.vmem %s2, %s249
      $region40: #{positional_encoding_2d_add.1} parent=35 // pred_fallthru
        _
    $region36: #{positional_encoding_2d_add.1} parent=5 // pred_fallthru
      _
  $region6: #{positional_encoding_2d_add.1} parent=0 // loop_footer
    %s12 = sadd.s32 1, %s8
  $region7: #{positional_encoding_2d_add.1} parent=0 // loop_footer_branch
    %7 = sbr.rel target = $region3
  $region8: #{positional_encoding_2d_add.1} parent=0 // loop_exit
    _

</llo_original>
